<compile_context>
chip_gen: v6e
topology: v6e:2x2x1
jax: 0.10.0
libtpu: 0.0.40
codegen_flags: <defaults>
</compile_context>

<pallas_src>
import functools
import numpy as np
import jax
import jax.numpy as jnp
from jax.experimental import pallas as pl
from jax.experimental.pallas import tpu as pltpu

# ------------------------- small, deterministic config -------------------------
B = 2            # batch
C_IMG = 3        # RGB channels
H = W = 16       # original image size (== original_size used by postprocess_masks)
IMG_SIZE = 32    # image_encoder.img_size (pad target in preprocess)
EMB_D = 32       # synthetic embedding channels
MASK_HW = 8      # low-res mask side produced by the decoder
MASK_THRESHOLD = 0.0
PIXEL_MEAN = np.array([123.675, 116.28, 103.53], np.float32)
PIXEL_STD = np.array([58.395, 57.12, 57.375], np.float32)


# ----------------------------------------------------------------------------
# Kernel 1: preprocess  -->  x * scale + shift  (scale = 1/std, shift = -mean/std),
#           then zero-pad bottom/right to (img_size, img_size).
# Grid over B ("parallel"); per-step block is one image.  Pad regions are written
# with zero stores that do NOT overlap the valid-data store.
# ----------------------------------------------------------------------------
def _preprocess_kernel(x_ref, scale_ref, shift_ref, out_ref, *, h, w):
    img_h, img_w = out_ref.shape[-2], out_ref.shape[-1]
    x = x_ref[...]                                            # (1, C, h, w)
    nchan = x.shape[1]
    # Broadcasted scale/shift: one mul + one add per element, no relayout.
    xn = (x * scale_ref[...] + shift_ref[...]).astype(out_ref.dtype)
    out_ref[:, :, :h, :w] = xn                                # valid block
    if img_w > w:                                             # right pad (rows 0..h-1)
        out_ref[:, :, :h, w:] = jnp.zeros((1, nchan, h, img_w - w), out_ref.dtype)
    if img_h > h:                                             # bottom pad (full width)
        out_ref[:, :, h:, :] = jnp.zeros((1, nchan, img_h - h, img_w), out_ref.dtype)


def preprocess_pallas(x, pixel_mean, pixel_std, img_size, *, out_dtype=None):
    b, c, h, w = x.shape
    out_dtype = x.dtype if out_dtype is None else out_dtype   # pass bf16 if encoder wants it
    scale = (1.0 / pixel_std).astype(jnp.float32).reshape(1, c, 1, 1)
    shift = (-pixel_mean / pixel_std).astype(jnp.float32).reshape(1, c, 1, 1)
    kernel = functools.partial(_preprocess_kernel, h=h, w=w)
    return pl.pallas_call(
        kernel,
        out_shape=jax.ShapeDtypeStruct((b, c, img_size, img_size), out_dtype),
        grid=(b,),
        in_specs=[
            pl.BlockSpec((1, c, h, w), lambda i: (i, 0, 0, 0)),
            pl.BlockSpec((1, c, 1, 1), lambda i: (0, 0, 0, 0)),   # scale (VMEM const)
            pl.BlockSpec((1, c, 1, 1), lambda i: (0, 0, 0, 0)),   # shift (VMEM const)
        ],
        out_specs=pl.BlockSpec((1, c, img_size, img_size), lambda i: (i, 0, 0, 0)),
        # TODO(synk): at real SAM sizes (1024x1024) add a row-tile grid axis
        # ((1, 3, 128-256, 1024) blocks) and set vmem_limit_bytes; W=1024 keeps the
        # trailing dim lane-dense there.
        compiler_params=pltpu.CompilerParams(dimension_semantics=("parallel",)),
    )(x, scale, shift)


# ----------------------------------------------------------------------------
# Kernel 2: postprocess_masks (+ fused threshold)
#   blend = lamda * bg + (lamda - 1) * fg         (exactly the PyTorch reference sign)
#   up    = Wh @ blend @ Ww^T                     (separable bilinear, two 2-D MXU dots)
#   mask  = (up > mask_threshold) as int8         (no post-kernel bool cast pass)
# Grid over N = B*M masks ("parallel").  Weights are resident constants.
# ----------------------------------------------------------------------------
def _postprocess_kernel(fg_ref, bg_ref, wh_ref, wwt_ref, *out_refs,
                        lamda, mask_threshold, return_ori):
    fg = fg_ref[0].astype(jnp.float32)                        # (h, w)
    bg = bg_ref[0].astype(jnp.float32)
    # Sign matches the PyTorch reference: lamda * mask_bg + (lamda - 1) * mask_logits.
    blend = lamda * bg + (lamda - 1.0) * fg                   # elementwise in f32 (VPU)
    wh = wh_ref[...]                                          # (OH, h)  f32 or bf16 (pre-cast)
    wwt = wwt_ref[...]                                        # (w, OW)
    wdt = wh.dtype                                            # only matmul operands use bf16
    t = jnp.dot(wh, blend.astype(wdt), preferred_element_type=jnp.float32)   # (OH, w)
    up = jnp.dot(t.astype(wdt), wwt, preferred_element_type=jnp.float32)     # (OH, OW)
    if return_ori:
        ori_ref, bin_ref = out_refs
        ori_ref[0] = up
    else:
        (bin_ref,) = out_refs
    bin_ref[0] = (up > mask_threshold).astype(bin_ref.dtype)


def _bilinear_weight_matrix(in_size, out_size):
    """Row-interpolation matrix matching F.interpolate(mode='bilinear', align_corners=False)."""
    scale = in_size / out_size
    dst = np.arange(out_size, dtype=np.float64)
    src = np.clip((dst + 0.5) * scale - 0.5, 0.0, None)
    i0 = np.minimum(np.floor(src).astype(np.int64), in_size - 1)
    i1 = np.minimum(i0 + 1, in_size - 1)
    w1 = src - i0
    w0 = 1.0 - w1
    mat = np.zeros((out_size, in_size), dtype=np.float64)
    np.add.at(mat, (np.arange(out_size), i0), w0)
    np.add.at(mat, (np.arange(out_size), i1), w1)
    return mat.astype(np.float32)


@functools.lru_cache(maxsize=None)
def _upsample_weights(in_h, in_w, out_h, out_w, bf16):
    """Cached (and optionally host-pre-cast-to-bf16) bilinear weight constants."""
    wh = _bilinear_weight_matrix(in_h, out_h)                 # (OH, h)
    wwt = np.ascontiguousarray(_bilinear_weight_matrix(in_w, out_w).T)   # (w, OW)
    dt = jnp.bfloat16 if bf16 else jnp.float32
    return jnp.asarray(wh, dtype=dt), jnp.asarray(wwt, dtype=dt)


def postprocess_masks_pallas(mask_logits, mask_bg, lamda, original_size,
                             mask_threshold=MASK_THRESHOLD, *, return_ori=False,
                             bf16_matmul=False):
    b, m, h, w = mask_logits.shape
    oh, ow = original_size
    n = b * m
    wh, wwt = _upsample_weights(h, w, oh, ow, bool(bf16_matmul))
    fg = mask_logits.reshape(n, h, w)                         # contiguous reshape (free)
    bg = mask_bg.reshape(n, h, w)

    kernel = functools.partial(
        _postprocess_kernel, lamda=float(lamda),
        mask_threshold=float(mask_threshold), return_ori=return_ori)

    mask_spec = pl.BlockSpec((1, oh, ow), lambda i: (i, 0, 0))
    bin_shape = jax.ShapeDtypeStruct((n, oh, ow), jnp.int8)
    if return_ori:
        out_shape = (jax.ShapeDtypeStruct((n, oh, ow), jnp.float32), bin_shape)
        out_specs = (mask_spec, mask_spec)
    else:
        out_shape = bin_shape
        out_specs = mask_spec

    result = pl.pallas_call(
        kernel,
        out_shape=out_shape,
        grid=(n,),
        in_specs=[
            pl.BlockSpec((1, h, w), lambda i: (i, 0, 0)),
            pl.BlockSpec((1, h, w), lambda i: (i, 0, 0)),
            pl.BlockSpec((oh, h), lambda i: (0, 0)),          # Wh   (resident constant)
            pl.BlockSpec((w, ow), lambda i: (0, 0)),          # Ww^T (resident constant)
        ],
        out_specs=out_specs,
        # TODO(synk): at real SAM sizes add an OH-tile grid axis, size the tile for
        # 64 MiB VMEM on v7x / 128 MiB on v5e-v6e, and set vmem_limit_bytes explicitly.
        compiler_params=pltpu.CompilerParams(dimension_semantics=("parallel",)),
    )(fg, bg, wh, wwt)

    if return_ori:
        ori, bin8 = result
        return ori.reshape(b, m, oh, ow), bin8.reshape(b, m, oh, ow)
    return result.reshape(b, m, oh, ow)


# ----------------------------------------------------------------------------
# Deterministic stand-ins for the unspecified sub-modules (plain JAX glue).
# ----------------------------------------------------------------------------
def _synthetic_image_encoder(image, params):
    # TODO(synk): ImageEncoderViT architecture not provided; simple patch-embed stand-in.
    x = preprocess_pallas(image, params["pixel_mean"], params["pixel_std"], IMG_SIZE)
    b = x.shape[0]
    p = IMG_SIZE // MASK_HW                                   # patch size -> 8x8 grid
    g = IMG_SIZE // p
    patches = (x.reshape(b, C_IMG, g, p, g, p)
                 .transpose(0, 2, 4, 1, 3, 5)
                 .reshape(b, g, g, C_IMG * p * p))
    emb = jnp.tanh(jnp.einsum("bhwk,kd->bhwd", patches, params["patch_proj"]))
    emb = emb.transpose(0, 3, 1, 2)                           # (B, D, 8, 8)
    return emb, [emb]


def _synthetic_clip_encoder(pil_images, captions, n_patches, params):
    # TODO(synk): ClipEncoder operates on PIL images + text; no Pallas equivalent for
    # tokenization, so a deterministic projection stands in for it.
    del captions
    b = pil_images.shape[0]
    pooled = jnp.mean(pil_images, axis=(1, 2))                          # (B, 3)
    clip_embedding = jnp.tanh(pooled @ params["clip_proj"])             # (B, D)
    npatch = 4 if n_patches is None else n_patches
    img_token = jnp.tile(clip_embedding[:, None, :], (1, npatch, 1))    # (B, P, D)
    pos_token = jnp.tile(params["pos_token"][None, :], (b, 1))          # (B, D)
    neg_token = jnp.tile(params["neg_token"][None, :], (b, 1))          # (B, D)
    return clip_embedding, img_token, pos_token, neg_token


def _synthetic_decoder(image_embedding, interm_embeddings, clip_embedding,
                       img_token, token, multimask_output):
    # TODO(synk): ClipCellDecoder architecture not provided; token/embedding dot-product stand-in.
    del interm_embeddings
    num_masks = 3 if multimask_output else 1
    q = token + clip_embedding + img_token.mean(axis=1)                       # (B, D)
    mask = jnp.einsum("bd,bdhw->bhw", q, image_embedding) / image_embedding.shape[1]
    mask_logits = jnp.repeat(mask[:, None], num_masks, axis=1)                # (B, M, h, w)
    iou_predictions = jax.nn.sigmoid(mask_logits.mean(axis=(2, 3)))           # (B, M)
    return mask_logits, iou_predictions


# ----------------------------------------------------------------------------
# ClipCellSam.forward
# ----------------------------------------------------------------------------
def clip_cell_sam_forward(params, batched_input, lamda=0.5, n_patches=None,
                          multimask_output=False, *, bf16_matmul=False):
    image = batched_input["image"]
    image_embedding, interm_embeddings = _synthetic_image_encoder(image, params)
    clip_embedding, img_token, pos_token, neg_token = _synthetic_clip_encoder(
        batched_input["pil_image"], batched_input["caption"], n_patches, params)

    mask_logits, iou_predictions = _synthetic_decoder(
        image_embedding, interm_embeddings, clip_embedding, img_token,
        pos_token, multimask_output)
    mask_bg, _ = _synthetic_decoder(
        image_embedding, interm_embeddings, clip_embedding, img_token,
        neg_token, multimask_output)

    original_size = image.shape[-2:]
    # masks is the thresholded 0/1 mask emitted as int8 directly from the kernel
    # (value-identical to the PyTorch bool mask; avoids a full HBM re-read/re-write
    # astype(bool) pass).  The float masks_ori is not materialized on this path.
    masks = postprocess_masks_pallas(mask_logits, mask_bg, lamda, original_size,
                                     MASK_THRESHOLD, return_ori=False,
                                     bf16_matmul=bf16_matmul)
    return {"masks": masks, "iou_predictions": iou_predictions,
            "logits": mask_logits, "bg": mask_bg}


# ----------------------------------------------------------------------------
if __name__ == "__main__":
    key = jax.random.PRNGKey(0)
    kimg, kp, kc, kt1, kt2 = jax.random.split(key, 5)

    image = jax.random.uniform(kimg, (B, C_IMG, H, W), jnp.float32, 0.0, 255.0)
    pil_image = jnp.transpose(image, (0, 2, 3, 1)) / 255.0     # NHWC "PIL-like"
    captions = ["a cell"] * B

    p_patch = IMG_SIZE // MASK_HW
    params = {
        "patch_proj": 0.05 * jax.random.normal(kp, (C_IMG * p_patch * p_patch, EMB_D), jnp.float32),
        "clip_proj": 0.5 * jax.random.normal(kc, (C_IMG, EMB_D), jnp.float32),
        "pos_token": jax.random.normal(kt1, (EMB_D,), jnp.float32),
        "neg_token": jax.random.normal(kt2, (EMB_D,), jnp.float32),
        "pixel_mean": jnp.asarray(PIXEL_MEAN),
        "pixel_std": jnp.asarray(PIXEL_STD),
    }

    batched_input = {"image": image, "pil_image": pil_image, "caption": captions}
    out = clip_cell_sam_forward(params, batched_input, lamda=0.5)
    jax.block_until_ready(out["masks"])

    # ---- preprocess kernel vs numpy reference --------------------------------------
    pre = preprocess_pallas(image, params["pixel_mean"], params["pixel_std"], IMG_SIZE)
    jax.block_until_ready(pre)
    img_np = np.asarray(image)
    ref_pre = np.zeros((B, C_IMG, IMG_SIZE, IMG_SIZE), np.float32)
    ref_pre[:, :, :H, :W] = ((img_np - PIXEL_MEAN.reshape(1, -1, 1, 1))
                             / PIXEL_STD.reshape(1, -1, 1, 1))
    np.testing.assert_allclose(np.asarray(pre), ref_pre, rtol=1e-5, atol=1e-5)

    # ---- postprocess kernel (f32 weights) vs numpy reference -----------------------
    masks_ori, masks_bin = postprocess_masks_pallas(
        out["logits"], out["bg"], 0.5, (H, W), MASK_THRESHOLD, return_ori=True)
    jax.block_until_ready(masks_ori)
    wh_np = _bilinear_weight_matrix(MASK_HW, H)
    ww_np = _bilinear_weight_matrix(MASK_HW, W)
    blend_np = 0.5 * np.asarray(out["bg"]) + (0.5 - 1.0) * np.asarray(out["logits"])
    ref = np.einsum("oh,bmhw,qw->bmoq", wh_np, blend_np, ww_np)
    np.testing.assert_allclose(np.asarray(masks_ori), ref, rtol=1e-4, atol=1e-4)
    np.testing.assert_array_equal(
        np.asarray(masks_bin), (np.asarray(masks_ori) > MASK_THRESHOLD).astype(np.int8))
    np.testing.assert_array_equal(np.asarray(out["masks"]), np.asarray(masks_bin))

    # ---- postprocess kernel (bf16 pre-cast weights) -- validates the bf16 path -----
    ori_bf16, bin_bf16 = postprocess_masks_pallas(
        out["logits"], out["bg"], 0.5, (H, W), MASK_THRESHOLD,
        return_ori=True, bf16_matmul=True)
    jax.block_until_ready(ori_bf16)
    np.testing.assert_allclose(np.asarray(ori_bf16), ref, rtol=2e-2, atol=2e-2)
    np.testing.assert_array_equal(
        np.asarray(bin_bf16), (np.asarray(ori_bf16) > MASK_THRESHOLD).astype(np.int8))

    print("KERNEL_OK")
</pallas_src>

<mosaic_0001>
module attributes {stable_mosaic.version = 11 : i64} {
  func.func @_preprocess_kernel(%arg0: i32, %arg1: memref<1x3x16x16xf32, #tpu.memory_space<vmem>>, %arg2: memref<1x3x1x1xf32, #tpu.memory_space<vmem>>, %arg3: memref<1x3x1x1xf32, #tpu.memory_space<vmem>>, %arg4: memref<1x3x32x32xf32, #tpu.memory_space<vmem>>) attributes {dimension_semantics = [#tpu.dimension_semantics<parallel>], iteration_bounds = array<i64: 2>, scalar_prefetch = 0 : i64, scratch_operands = 0 : i64, tpu.core_type = #tpu.core_type<tc>, window_params = [{transform_indices = @transform_0, window_bounds = array<i64: 1, 3, 16, 16>}, {pipeline_mode = #tpu.pipeline_mode<synchronous>, transform_indices = @transform_1, window_bounds = array<i64: 1, 3, 1, 1>}, {pipeline_mode = #tpu.pipeline_mode<synchronous>, transform_indices = @transform_2, window_bounds = array<i64: 1, 3, 1, 1>}, {transform_indices = @transform_3, window_bounds = array<i64: 1, 3, 32, 32>}]} {
    %c0 = arith.constant 0 : index
    %c0_0 = arith.constant 0 : index
    %c0_1 = arith.constant 0 : index
    %c0_2 = arith.constant 0 : index
    %0 = vector.load %arg1[%c0, %c0_0, %c0_1, %c0_2] : memref<1x3x16x16xf32, #tpu.memory_space<vmem>>, vector<1x3x16x16xf32>
    %c0_3 = arith.constant 0 : index
    %c0_4 = arith.constant 0 : index
    %c0_5 = arith.constant 0 : index
    %c0_6 = arith.constant 0 : index
    %1 = vector.load %arg2[%c0_3, %c0_4, %c0_5, %c0_6] : memref<1x3x1x1xf32, #tpu.memory_space<vmem>>, vector<1x3x1x1xf32>
    %2 = vector.broadcast %1 : vector<1x3x1x1xf32> to vector<1x3x16x16xf32>
    %3 = arith.mulf %0, %2 : vector<1x3x16x16xf32>
    %c0_7 = arith.constant 0 : index
    %c0_8 = arith.constant 0 : index
    %c0_9 = arith.constant 0 : index
    %c0_10 = arith.constant 0 : index
    %4 = vector.load %arg3[%c0_7, %c0_8, %c0_9, %c0_10] : memref<1x3x1x1xf32, #tpu.memory_space<vmem>>, vector<1x3x1x1xf32>
    %5 = vector.broadcast %4 : vector<1x3x1x1xf32> to vector<1x3x16x16xf32>
    %6 = arith.addf %3, %5 : vector<1x3x16x16xf32>
    %c0_11 = arith.constant 0 : index
    %c0_12 = arith.constant 0 : index
    %c0_13 = arith.constant 0 : index
    %c0_14 = arith.constant 0 : index
    %7 = vector.load %arg4[%c0_11, %c0_12, %c0_13, %c0_14] : memref<1x3x32x32xf32, #tpu.memory_space<vmem>>, vector<1x3x16x16xf32>
    tpu.vector_store %arg4[%c0_11, %c0_12, %c0_13, %c0_14], %6 {strides = array<i32>} : memref<1x3x32x32xf32, #tpu.memory_space<vmem>>, vector<1x3x16x16xf32>,
    %cst = arith.constant 0.000000e+00 : f32
    %8 = vector.broadcast %cst : f32 to vector<1x3x16x16xf32>
    %c0_15 = arith.constant 0 : index
    %c0_16 = arith.constant 0 : index
    %c0_17 = arith.constant 0 : index
    %c16 = arith.constant 16 : index
    %9 = vector.load %arg4[%c0_15, %c0_16, %c0_17, %c16] : memref<1x3x32x32xf32, #tpu.memory_space<vmem>>, vector<1x3x16x16xf32>
    tpu.vector_store %arg4[%c0_15, %c0_16, %c0_17, %c16], %8 {strides = array<i32>} : memref<1x3x32x32xf32, #tpu.memory_space<vmem>>, vector<1x3x16x16xf32>,
    %cst_18 = arith.constant 0.000000e+00 : f32
    %10 = vector.broadcast %cst_18 : f32 to vector<1x3x16x32xf32>
    %c0_19 = arith.constant 0 : index
    %c0_20 = arith.constant 0 : index
    %c16_21 = arith.constant 16 : index
    %c0_22 = arith.constant 0 : index
    %11 = vector.load %arg4[%c0_19, %c0_20, %c16_21, %c0_22] : memref<1x3x32x32xf32, #tpu.memory_space<vmem>>, vector<1x3x16x32xf32>
    tpu.vector_store %arg4[%c0_19, %c0_20, %c16_21, %c0_22], %10 {strides = array<i32>} : memref<1x3x32x32xf32, #tpu.memory_space<vmem>>, vector<1x3x16x32xf32>,
    return
  }
  func.func @transform_0(%arg0: i32) -> (i32, i32, i32, i32) {
    %c0_i32 = arith.constant 0 : i32
    %c0_i32_0 = arith.constant 0 : i32
    %c0_i32_1 = arith.constant 0 : i32
    %c0_i32_2 = arith.constant 0 : i32
    return %arg0, %c0_i32, %c0_i32_0, %c0_i32_1 : i32, i32, i32, i32
  }
  func.func @transform_1(%arg0: i32) -> (i32, i32, i32, i32) {
    %c0_i32 = arith.constant 0 : i32
    %c0_i32_0 = arith.constant 0 : i32
    %c0_i32_1 = arith.constant 0 : i32
    %c0_i32_2 = arith.constant 0 : i32
    %c0_i32_3 = arith.constant 0 : i32
    return %c0_i32, %c0_i32_0, %c0_i32_1, %c0_i32_2 : i32, i32, i32, i32
  }
  func.func @transform_2(%arg0: i32) -> (i32, i32, i32, i32) {
    %c0_i32 = arith.constant 0 : i32
    %c0_i32_0 = arith.constant 0 : i32
    %c0_i32_1 = arith.constant 0 : i32
    %c0_i32_2 = arith.constant 0 : i32
    %c0_i32_3 = arith.constant 0 : i32
    return %c0_i32, %c0_i32_0, %c0_i32_1, %c0_i32_2 : i32, i32, i32, i32
  }
  func.func @transform_3(%arg0: i32) -> (i32, i32, i32, i32) {
    %c0_i32 = arith.constant 0 : i32
    %c0_i32_0 = arith.constant 0 : i32
    %c0_i32_1 = arith.constant 0 : i32
    %c0_i32_2 = arith.constant 0 : i32
    return %arg0, %c0_i32, %c0_i32_0, %c0_i32_1 : i32, i32, i32, i32
  }
}

</mosaic_0001>

<llo_original>
// kernel: tpu_custom_call.1
$region0: #{tpu_custom_call.1}
  #allocation0 [shape = 'u32[]', space=smem, size = 0x4, offset = 0x4, fixed_abs, tag = 'smem constant byte address 0x4 - core index']
  #allocation1 [shape = 'u32[144,128]{1,0:T(1,128)}', space=vmem, size = 0x12000, scoped, tag = 'internal scratch']
  %s0 = inlined_call_operand.hbm [shape: f32[2,3,16,16], index: 0, kind: input, shape index: {}]
  %s1 = inlined_call_operand.vmem [shape: f32[1,3,1,1], index: 1, kind: input, shape index: {}]
  %s2 = inlined_call_operand.vmem [shape: f32[1,3,1,1], index: 2, kind: input, shape index: {}]
  %s3 = inlined_call_operand.hbm [shape: f32[2,3,32,32], index: 3, kind: output, shape index: {}]
  %s4 = sld [smem:[#allocation0]]
  $region49: #{tpu_custom_call.1} parent=0
    _
  %s6 = ssub.s32 1, %s4
  %s7 = scalar_select 0, %s6, %s4
  $region1: #{tpu_custom_call.1} parent=0
    #allocation2 [shape = 'u8[49152]{0}', space=vmem, size = 0xc000, scoped, tag = 'input window, operand 0']
    #allocation3 [shape = 's32[2]{0}', space=sflag, size = 0x8, scoped, tag = 'scoped memory for tpu_custom_call.1']
    #allocation4 [shape = 's32[2]{0}', space=sflag, size = 0x8, scoped, tag = 'scoped memory for tpu_custom_call.1']
    #allocation5 [shape = 'u8[98304]{0}', space=vmem, size = 0x18000, scoped, tag = 'output window, operand 0']
    %8 = vsyncpa [#allocation3], 0
    %s9 = scalar_lea.sflag [#allocation3], 1
    %10 = vsyncpa %s9, 0
    %11 = vsyncpa [#allocation4], 0
    %s12 = scalar_lea.sflag [#allocation4], 1
    %13 = vsyncpa %s12, 0
    loop: start=0, step=1, limit=4
    $region2: #{tpu_custom_call.1} parent=1 // loop_pre_header
      _
    $region3: #{tpu_custom_call.1} parent=1 // loop_header
      %s15 = sphi 0, %s19
      %p16 = scmp.ge.s32.totalorder %s15, 4
      %s25 = sphi 0, %s27
      %s28 = sphi 0, %s25
      %s29 = sphi 0, %s28
      %s45 = sphi 0, %s29
      %s49 = sphi 0, %s49
      %s51 = sphi 0, %s49
      %s52 = sphi 0, %s51
      %s66 = sphi 0, %s52
      %s70 = sphi 0, %s70
      %s72 = sphi 0, %s70
      %s73 = sphi 0, %s72
      %s87 = sphi 0, %s73
      %s93 = sphi 0, %s95
      %s96 = sphi 0, %s93
      %s97 = sphi 0, %s96
      %s113 = sphi 0, %s97
    $region4: #{tpu_custom_call.1} parent=1 // loop_header_branch
      %18 = sbr.rel (%p16) target = $region8
    $region5: #{tpu_custom_call.1} parent=1 // loop_body
      %s20 = ssub.s32 %s15, 1
      %s21 = ssub.s32 %s15, 2
      %s22 = sadd.s32 %s15, 1
      %s23 = ssub.s32 %s15, %s22
      %p24 = scmp.eq.s32.totalorder %s23, 0
      %s26 = sadd.s32 %s25, 1
      %s27 = scalar_select %p24, %s25, %s26
      %p30 = pneg %p24
      %p31 = scmp.eq.s32.totalorder %s15, 1
      %p32 = por %p30, %p31
      %p33 = scmp.ne.s32.totalorder %s25, %s28
      %p34 = scmp.eq.s32.totalorder %s15, 0
      %p35 = por %p33, %p34
      %p36 = scmp.ne.s32.totalorder %s25, %s28
      %p37 = scmp.eq.s32.totalorder %s20, 1
      %p38 = por %p36, %p37
      %p39 = scmp.ne.s32.totalorder %s28, %s29
      %p40 = scmp.eq.s32.totalorder %s20, 0
      %p41 = por %p39, %p40
      %p42 = scmp.ne.s32.totalorder %s28, %s29
      %p43 = scmp.eq.s32.totalorder %s21, 1
      %p44 = por %p42, %p43
      %p46 = scmp.ne.s32.totalorder %s29, %s45
      %p47 = scmp.eq.s32.totalorder %s21, 0
      %p48 = por %p46, %p47
      %s50 = sadd.s32 %s49, 1
      %p53 = scmp.eq.s32.totalorder %s15, 1
      %p54 = scmp.ne.s32.totalorder %s49, %s51
      %p55 = scmp.eq.s32.totalorder %s15, 0
      %p56 = por %p54, %p55
      %p57 = scmp.ne.s32.totalorder %s49, %s51
      %p58 = scmp.eq.s32.totalorder %s20, 1
      %p59 = por %p57, %p58
      %p60 = scmp.ne.s32.totalorder %s51, %s52
      %p61 = scmp.eq.s32.totalorder %s20, 0
      %p62 = por %p60, %p61
      %p63 = scmp.ne.s32.totalorder %s51, %s52
      %p64 = scmp.eq.s32.totalorder %s21, 1
      %p65 = por %p63, %p64
      %p67 = scmp.ne.s32.totalorder %s52, %s66
      %p68 = scmp.eq.s32.totalorder %s21, 0
      %p69 = por %p67, %p68
      %s71 = sadd.s32 %s70, 1
      %p74 = scmp.eq.s32.totalorder %s15, 1
      %p75 = scmp.ne.s32.totalorder %s70, %s72
      %p76 = scmp.eq.s32.totalorder %s15, 0
      %p77 = por %p75, %p76
      %p78 = scmp.ne.s32.totalorder %s70, %s72
      %p79 = scmp.eq.s32.totalorder %s20, 1
      %p80 = por %p78, %p79
      %p81 = scmp.ne.s32.totalorder %s72, %s73
      %p82 = scmp.eq.s32.totalorder %s20, 0
      %p83 = por %p81, %p82
      %p84 = scmp.ne.s32.totalorder %s72, %s73
      %p85 = scmp.eq.s32.totalorder %s21, 1
      %p86 = por %p84, %p85
      %p88 = scmp.ne.s32.totalorder %s73, %s87
      %p89 = scmp.eq.s32.totalorder %s21, 0
      %p90 = por %p88, %p89
      %s91 = ssub.s32 %s15, %s22
      %p92 = scmp.eq.s32.totalorder %s91, 0
      %s94 = sadd.s32 %s93, 1
      %s95 = scalar_select %p92, %s93, %s94
      %p98 = pneg %p92
      %p99 = scmp.eq.s32.totalorder %s15, 1
      %p100 = por %p98, %p99
      %p101 = scmp.ne.s32.totalorder %s93, %s96
      %p102 = scmp.eq.s32.totalorder %s15, 0
      %p103 = por %p101, %p102
      %p104 = scmp.ne.s32.totalorder %s93, %s96
      %p105 = scmp.eq.s32.totalorder %s20, 1
      %p106 = por %p104, %p105
      %p107 = scmp.ne.s32.totalorder %s96, %s97
      %p108 = scmp.eq.s32.totalorder %s20, 0
      %p109 = por %p107, %p108
      %p110 = scmp.ne.s32.totalorder %s96, %s97
      %p111 = scmp.eq.s32.totalorder %s21, 1
      %p112 = por %p110, %p111
      %p114 = scmp.ne.s32.totalorder %s97, %s113
      %p115 = scmp.eq.s32.totalorder %s21, 0
      %p116 = por %p114, %p115
      %p117 = scmp.le.s32.totalorder 1, %s15
      %p118 = scmp.lt.s32.totalorder %s15, 3
      %p119 = pnand %p117, %p118
      %p120 = pneg %p119
      // Predicated region
      $region9: #{tpu_custom_call.1} parent=5 // pred_check
        _
      $region10: #{tpu_custom_call.1} parent=5 // pred_check_branch
        %122 = sbr.rel (%p119) target = $region12
      $region11: #{tpu_custom_call.1} parent=5 // pred_region
        %s123 = ssub.s32 %s15, 1
        // Predicated region
        $region13: #{tpu_custom_call.1} parent=11 // pred_check
          %p124 = pneg %p62
        $region14: #{tpu_custom_call.1} parent=11 // pred_check_branch
          %126 = sbr.rel (%p124) target = $region16
        $region15: #{tpu_custom_call.1} parent=11 // pred_region
          _
        $region16: #{tpu_custom_call.1} parent=11 // pred_fallthru
          _
        // Predicated region
        $region17: #{tpu_custom_call.1} parent=11 // pred_check
          %p127 = pneg %p83
        $region18: #{tpu_custom_call.1} parent=11 // pred_check_branch
          %129 = sbr.rel (%p127) target = $region20
        $region19: #{tpu_custom_call.1} parent=11 // pred_region
          _
        $region20: #{tpu_custom_call.1} parent=11 // pred_fallthru
          _
      $region12: #{tpu_custom_call.1} parent=5 // pred_fallthru
        _
      %p130 = scmp.lt.s32.totalorder %s15, 2
      // Predicated region
      $region21: #{tpu_custom_call.1} parent=5 // pred_check
        %p131 = pneg %p130
      $region22: #{tpu_custom_call.1} parent=5 // pred_check_branch
        %133 = sbr.rel (%p131) target = $region24
      $region23: #{tpu_custom_call.1} parent=5 // pred_region
        // Predicated region
        $region25: #{tpu_custom_call.1} parent=23 // pred_check
          %p134 = pneg %p35
        $region26: #{tpu_custom_call.1} parent=23 // pred_check_branch
          %136 = sbr.rel (%p134) target = $region28
        $region27: #{tpu_custom_call.1} parent=23 // pred_region
          %s137 = sand.u32 %s25, 1
          %s138 = scalar_lea.sflag [#allocation3], %s137
          %s139 = sand.u32 %s25, 1
          %s140 = smul.addr %s139, 48
          %s141 = scalar_lea.vmem [#allocation2], %s140
          %s143 = ssub.s32 768, 768
          %144 = vsyncadd %s138, %s143
          %s145 = smul.addr %s15, 6
          %s146 = smul.addr %s145, 128
          %s147 = scalar_lea.hbm %s0, %s146
          %s148 = sshll.u32 %s141, 4
          %s149 = int_to_ptr.vmem [resolvable:$true] %s148
          %154 = dma.hbm_to_vmem [thread:$0]  %s147, 768, %s149, %s138, 128, 128, 8
        $region28: #{tpu_custom_call.1} parent=23 // pred_fallthru
          _
      $region24: #{tpu_custom_call.1} parent=5 // pred_fallthru
        _
      %p155 = scmp.le.s32.totalorder 1, %s15
      %p156 = scmp.lt.s32.totalorder %s15, 3
      %p157 = pnand %p155, %p156
      %p158 = pneg %p157
      // Predicated region
      $region29: #{tpu_custom_call.1} parent=5 // pred_check
        _
      $region30: #{tpu_custom_call.1} parent=5 // pred_check_branch
        %160 = sbr.rel (%p157) target = $region32
      $region31: #{tpu_custom_call.1} parent=5 // pred_region
        %s161 = ssub.s32 %s15, 1
        %s162 = sand.u32 %s28, 1
        %s163 = scalar_lea.sflag [#allocation3], %s162
        %s164 = sand.u32 %s28, 1
        %s165 = smul.addr %s164, 48
        %s166 = scalar_lea.vmem [#allocation2], %s165
        // Predicated region
        $region33: #{tpu_custom_call.1} parent=31 // pred_check
          %p167 = pneg %p41
        $region34: #{tpu_custom_call.1} parent=31 // pred_check_branch
          %169 = sbr.rel (%p167) target = $region36
        $region35: #{tpu_custom_call.1} parent=31 // pred_region
          %170 = dma.done %s163, 768
        $region36: #{tpu_custom_call.1} parent=31 // pred_fallthru
          _
        %s171 = sand.u32 %s28, 1
        %s172 = scalar_lea.sflag [#allocation3], %s171
        %s173 = sand.u32 %s28, 1
        %s174 = smul.addr %s173, 48
        %s175 = scalar_lea.vmem [#allocation2], %s174
        %p176 = pneg %p41
        %p177 = pneg %p38
        %p178 = pneg %p62
        %p179 = pneg %p59
        %p180 = pneg %p83
        %p181 = pneg %p80
        %p182 = pneg %p109
        %p183 = pneg %p106
        %s184 = sand.u32 %s96, 1
        %s185 = scalar_lea.sflag [#allocation4], %s184
        %s186 = sand.u32 %s96, 1
        %s187 = smul.addr %s186, 96
        %s188 = scalar_lea.vmem [#allocation5], %s187
        %v189 = vld [vmem:[%s166] sm:$0xff]
        %v190 = vld [vmem:[%s166 + $0x8] sm:$0xff]
        %v191 = vld [vmem:[%s166 + $0x10] sm:$0xff]
        %v192 = vld [vmem:[%s166 + $0x18] sm:$0xff]
        %v193 = vld [vmem:[%s166 + $0x20] sm:$0xff]
        %v194 = vld [vmem:[%s166 + $0x28] sm:$0xff]
        %v195 = vld [vmem:[%s1] sm:$0x1]
        %v196 = vld [vmem:[%s1 + $0x1] sm:$0x1]
        %v197 = vld [vmem:[%s1 + $0x2] sm:$0x1]
        %v201 = vlaneseq
        %v202 = vshrl.u32 %v201, 7
        %v203 = vsub.s32 0, %v202
        %v204 = vrot.slane %v195, %v203
        %v205 = vlaneseq
        %v206 = vshrl.u32 %v205, 7
        %v207 = vsub.s32 0, %v206
        %v208 = vrot.slane %v196, %v207
        %v209 = vlaneseq
        %v210 = vshrl.u32 %v209, 7
        %v211 = vsub.s32 0, %v210
        %v212 = vrot.slane %v197, %v211
        %213 = vset.pattern.permute.xlu0 0
        %214 = vperm.xlu0 %213, %v204
        %v215 = vpop.permute.xlu0 %214
        %217 = vset.pattern.permute.xlu0 0
        %218 = vperm.xlu0 %217, %v208
        %v219 = vpop.permute.xlu0 %218
        %221 = vset.pattern.permute.xlu0 0
        %222 = vperm.xlu0 %221, %v212
        %v223 = vpop.permute.xlu0 %222
        %v225 = vmul.f32 %v189, %v215
        %v226 = vmul.f32 %v190, %v215
        %v227 = vmul.f32 %v191, %v219
        %v228 = vmul.f32 %v192, %v219
        %v229 = vmul.f32 %v193, %v223
        %v230 = vmul.f32 %v194, %v223
        %v231 = vld [vmem:[%s2] sm:$0x1]
        %v232 = vld [vmem:[%s2 + $0x1] sm:$0x1]
        %v233 = vld [vmem:[%s2 + $0x2] sm:$0x1]
        %v237 = vlaneseq
        %v238 = vshrl.u32 %v237, 7
        %v239 = vsub.s32 0, %v238
        %v240 = vrot.slane %v231, %v239
        %v241 = vlaneseq
        %v242 = vshrl.u32 %v241, 7
        %v243 = vsub.s32 0, %v242
        %v244 = vrot.slane %v232, %v243
        %v245 = vlaneseq
        %v246 = vshrl.u32 %v245, 7
        %v247 = vsub.s32 0, %v246
        %v248 = vrot.slane %v233, %v247
        %249 = vset.pattern.permute.xlu0 0
        %250 = vperm.xlu0 %249, %v240
        %v251 = vpop.permute.xlu0 %250
        %253 = vset.pattern.permute.xlu0 0
        %254 = vperm.xlu0 %253, %v244
        %v255 = vpop.permute.xlu0 %254
        %257 = vset.pattern.permute.xlu0 0
        %258 = vperm.xlu0 %257, %v248
        %v259 = vpop.permute.xlu0 %258
        %v261 = vadd.f32 %v225, %v251
        %v262 = vadd.f32 %v226, %v251
        %v263 = vadd.f32 %v227, %v255
        %v264 = vadd.f32 %v228, %v255
        %v265 = vadd.f32 %v229, %v259
        %v266 = vadd.f32 %v230, %v259
        %vm267 = vcmask 130048
        %268 = vst.msk [vmem:[%s188] sm:$0xff] %vm267, %v261
        %269 = vst.msk [vmem:[%s188 + $0x8] sm:$0xff] %vm267, %v262
        %270 = vst.msk [vmem:[%s188 + $0x20] sm:$0xff] %vm267, %v263
        %271 = vst.msk [vmem:[%s188 + $0x28] sm:$0xff] %vm267, %v264
        %272 = vst.msk [vmem:[%s188 + $0x40] sm:$0xff] %vm267, %v265
        %273 = vst.msk [vmem:[%s188 + $0x48] sm:$0xff] %vm267, %v266
        %vm274 = vcmask 261248
        %275 = vst.msk [vmem:[%s188] sm:$0xff] %vm274, 0.0
        %276 = vst.msk [vmem:[%s188 + $0x8] sm:$0xff] %vm274, 0.0
        %277 = vst.msk [vmem:[%s188 + $0x20] sm:$0xff] %vm274, 0.0
        %278 = vst.msk [vmem:[%s188 + $0x28] sm:$0xff] %vm274, 0.0
        %279 = vst.msk [vmem:[%s188 + $0x40] sm:$0xff] %vm274, 0.0
        %280 = vst.msk [vmem:[%s188 + $0x48] sm:$0xff] %vm274, 0.0
        %vm281 = vcmask 261120
        %282 = vst.msk [vmem:[%s188 + $0x10] sm:$0xff] %vm281, 0.0
        %283 = vst.msk [vmem:[%s188 + $0x18] sm:$0xff] %vm281, 0.0
        %284 = vst.msk [vmem:[%s188 + $0x30] sm:$0xff] %vm281, 0.0
        %285 = vst.msk [vmem:[%s188 + $0x38] sm:$0xff] %vm281, 0.0
        %286 = vst.msk [vmem:[%s188 + $0x50] sm:$0xff] %vm281, 0.0
        %287 = vst.msk [vmem:[%s188 + $0x58] sm:$0xff] %vm281, 0.0
        %s288 = sand.u32 %s96, 1
        %s289 = scalar_lea.sflag [#allocation4], %s288
        %s290 = sand.u32 %s96, 1
        %s291 = smul.addr %s290, 96
        %s292 = scalar_lea.vmem [#allocation5], %s291
        // Predicated region
        $region37: #{tpu_custom_call.1} parent=31 // pred_check
          %p293 = pneg %p106
        $region38: #{tpu_custom_call.1} parent=31 // pred_check_branch
          %295 = sbr.rel (%p293) target = $region40
        $region39: #{tpu_custom_call.1} parent=31 // pred_region
          %s297 = ssub.s32 1536, 1536
          %298 = vsyncadd %s289, %s297
          %s299 = smul.addr %s20, 12
          %s300 = smul.addr %s299, 128
          %s301 = scalar_lea.hbm %s3, %s300
          %s302 = sshll.u32 %s292, 4
          %s303 = int_to_ptr.vmem [resolvable:$true] %s302
          %308 = dma.vmem_to_hbm [thread:$0]  %s303, 1536, %s301, %s289, 128, 128, 8
        $region40: #{tpu_custom_call.1} parent=31 // pred_fallthru
          _
      $region32: #{tpu_custom_call.1} parent=5 // pred_fallthru
        _
      %p309 = scmp.le.s32.totalorder 2, %s15
      // Predicated region
      $region41: #{tpu_custom_call.1} parent=5 // pred_check
        %p310 = pneg %p309
      $region42: #{tpu_custom_call.1} parent=5 // pred_check_branch
        %312 = sbr.rel (%p310) target = $region44
      $region43: #{tpu_custom_call.1} parent=5 // pred_region
        %s313 = ssub.s32 %s15, 2
        // Predicated region
        $region45: #{tpu_custom_call.1} parent=43 // pred_check
          %p314 = pneg %p112
        $region46: #{tpu_custom_call.1} parent=43 // pred_check_branch
          %316 = sbr.rel (%p314) target = $region48
        $region47: #{tpu_custom_call.1} parent=43 // pred_region
          %s317 = sand.u32 %s97, 1
          %s318 = scalar_lea.sflag [#allocation4], %s317
          %s319 = sand.u32 %s97, 1
          %s320 = smul.addr %s319, 96
          %s321 = scalar_lea.vmem [#allocation5], %s320
          %322 = dma.done %s318, 1536
        $region48: #{tpu_custom_call.1} parent=43 // pred_fallthru
          _
      $region44: #{tpu_custom_call.1} parent=5 // pred_fallthru
        _
    $region6: #{tpu_custom_call.1} parent=1 // loop_footer
      %s19 = sadd.s32 1, %s15
    $region7: #{tpu_custom_call.1} parent=1 // loop_footer_branch
      %14 = sbr.rel target = $region3
    $region8: #{tpu_custom_call.1} parent=1 // loop_exit
      _
    %323 = vsyncpa [#allocation3], 1
    %s324 = scalar_lea.sflag [#allocation3], 1
    %325 = vsyncpa %s324, 1
    %326 = vsyncpa [#allocation4], 1
    %s327 = scalar_lea.sflag [#allocation4], 1
    %328 = vsyncpa %s327, 1

</llo_original>
